<compile_context>
chip_gen: v5e
topology: v5e:2x2
jax: 0.10.0
libtpu: 0.0.40
codegen_flags: <defaults>
</compile_context>

<pallas_src>
import math

import jax
import jax.numpy as jnp
from jax.experimental import pallas as pl
from jax.experimental.pallas import tpu as pltpu

LANE = 128
ROW_ALIGN = 16          # bf16 packed sublane pair (f32 minimum would be 8)
MiB = 1024 * 1024


def _round_up(x, m):
    return ((x + m - 1) // m) * m


def _vmem_budget_bytes():
    """~75% of this generation's VMEM capacity (conservative fallback: v7x)."""
    try:
        cap = int(pltpu.get_tpu_info().vmem_capacity_bytes)
    except Exception:
        cap = 64 * MiB          # v7x per-TensorCore VMEM — safe everywhere
    return (cap * 3) // 4


def _largest_divisor(n, *, align, cap):
    """Largest divisor of n that is a multiple of `align` and <= cap."""
    cap = max(align, (cap // align) * align)
    t = cap
    while t >= align:
        if n % t == 0:
            return t
        t -= align
    return align


def _plan_aggregation(N, hmax, budget, elt):
    """Pick (Np, tile_n, tile_k, resident_support) for the aggregation kernels."""
    if N <= 1024:
        # Small/medium graph: single K step, full-dim blocks (no (8,128)
        # divisibility needed).  Split rows in two when cheap so the
        # "parallel" axis can still shard across 2 TCs.
        Np = N
        tile_k = N
        tile_n = N // 2 if (N >= 256 and N % 32 == 0) else N
    else:
        Np = _round_up(N, LANE)           # zero-padded nodes (exact, sliced off)
        k_cap = 4096 if budget >= 80 * MiB else 2048
        tile_k = _largest_divisor(Np, align=LANE, cap=k_cap)
        tile_n = _largest_divisor(Np, align=ROW_ALIGN,
                                  cap=min(1024, Np // 2))   # >=2 row steps

    limit = int(budget * 0.9)

    def fits(tn, tk, resident):
        adj_b = 2 * tn * tk * elt                               # double-buffered
        sup_b = (2 * Np * hmax * elt) if resident else (2 * tk * hmax * elt)
        acc_b = tn * hmax * 4
        out_b = 2 * tn * hmax * 4                               # worst case f32
        w_b = 2 * hmax * hmax * elt + 2 * hmax * 4              # fused W2 + bias
        return adj_b + sup_b + acc_b + out_b + w_b <= limit

    resident = (2 * Np * hmax * elt) <= budget // 3
    while (not fits(tile_n, tile_k, resident)
           and tile_k > LANE and tile_k % (2 * LANE) == 0):
        tile_k //= 2
    while (not fits(tile_n, tile_k, resident)
           and tile_n > ROW_ALIGN and tile_n % (2 * ROW_ALIGN) == 0):
        tile_n //= 2
    if not fits(tile_n, tile_k, resident):
        resident = False
    return Np, tile_n, tile_k, resident


def _plan_transform_tile(Np, F, h1p, tile_n, budget, elt):
    """Row tile for the x @ W1 kernel, kept within the VMEM budget (v7x!)."""
    tile_m = tile_n
    limit = int(budget * 0.9)

    def fits(tm):
        return (2 * tm * F * elt          # x row tiles, double-buffered
                + 2 * F * h1p * elt       # resident W1
                + 2 * tm * h1p * elt) <= limit

    while not fits(tile_m) and tile_m > ROW_ALIGN and tile_m % (2 * ROW_ALIGN) == 0:
        tile_m //= 2
    # TODO(synk): for extreme F where even tile_m=16 (or resident W1) exceeds
    # VMEM, add a K-tile over F with an f32 accumulator.
    return tile_m


# ---------------------------------------------------------------------------
# Kernel 1: feature transform   s1 = x @ W1   (computed once, row-tiled)
# ---------------------------------------------------------------------------
def _transform_kernel(x_ref, w_ref, out_ref):
    out_ref[...] = jnp.dot(
        x_ref[...], w_ref[...], preferred_element_type=jnp.float32
    ).astype(out_ref.dtype)


def feature_transform(x, w, *, tile_m, vmem_limit):
    Np, F = x.shape
    Fw, H = w.shape
    assert F == Fw and Np % tile_m == 0

    return pl.pallas_call(
        _transform_kernel,
        out_shape=jax.ShapeDtypeStruct((Np, H), x.dtype),
        grid_spec=pltpu.PrefetchScalarGridSpec(
            num_scalar_prefetch=0,
            grid=(Np // tile_m,),
            in_specs=[
                pl.BlockSpec((tile_m, F), lambda i: (i, 0)),   # x row tile
                pl.BlockSpec((F, H), lambda i: (0, 0)),        # W (grid-invariant)
            ],
            out_specs=pl.BlockSpec((tile_m, H), lambda i: (i, 0)),
        ),
        compiler_params=pltpu.CompilerParams(
            dimension_semantics=("parallel",),
            vmem_limit_bytes=vmem_limit,
        ),
    )(x, w)


# ---------------------------------------------------------------------------
# Kernels 2/3: aggregation   relu(adj @ support + b) [ @ W_next if fused ]
#   - K-tiled with f32 VMEM accumulator, bias folded into the k==0 init.
#   - `support` VMEM-resident (fetched once) when `resident`, else streamed
#     as (tile_k, H) blocks.
#   - If `fused`, the epilogue applies the next layer's weight so the hidden
#     activation never hits HBM.
# ---------------------------------------------------------------------------
def _make_agg_kernel(*, tile_k, resident, fused):
    def kernel(adj_ref, s_ref, b_ref, *rest):
        if fused:
            w_ref, out_ref, acc_ref = rest
        else:
            w_ref = None
            out_ref, acc_ref = rest
        k = pl.program_id(1)

        @pl.when(k == 0)
        def _():
            # Bias folded into the accumulator init (epilogue is ReLU only).
            acc_ref[...] = jnp.broadcast_to(b_ref[...], acc_ref.shape)

        if resident:
            start = pl.multiple_of(k * tile_k, tile_k)
            s_blk = s_ref[pl.ds(start, tile_k), :]
        else:
            s_blk = s_ref[...]

        acc_ref[...] += jnp.dot(adj_ref[...], s_blk,
                                preferred_element_type=jnp.float32)

        @pl.when(k == pl.num_programs(1) - 1)
        def _():
            act = jnp.maximum(acc_ref[...], 0.0)
            if fused:
                out_ref[...] = jnp.dot(
                    act.astype(w_ref.dtype), w_ref[...],
                    preferred_element_type=jnp.float32,
                ).astype(out_ref.dtype)
            else:
                out_ref[...] = act.astype(out_ref.dtype)

    return kernel


def aggregate(adj, support, bias, w_next=None, *, tile_n, tile_k, resident,
              out_dtype, vmem_limit):
    Np, Nk = adj.shape
    Ns, Hin = support.shape
    assert Np == Nk == Ns
    assert Np % tile_n == 0 and Np % tile_k == 0
    Hout = w_next.shape[1] if w_next is not None else Hin

    b2d = bias.reshape(1, Hin).astype(jnp.float32)

    in_specs = [pl.BlockSpec((tile_n, tile_k), lambda i, k: (i, k))]   # adj tile
    if resident:
        # Full support kept VMEM-resident (grid-invariant -> fetched once).
        in_specs.append(pl.BlockSpec((Np, Hin), lambda i, k: (0, 0)))
    else:
        in_specs.append(pl.BlockSpec((tile_k, Hin), lambda i, k: (k, 0)))
    in_specs.append(pl.BlockSpec((1, Hin), lambda i, k: (0, 0)))       # bias
    operands = [adj, support, b2d]
    if w_next is not None:
        in_specs.append(pl.BlockSpec((Hin, Hout), lambda i, k: (0, 0)))  # W2
        operands.append(w_next)

    kernel = _make_agg_kernel(tile_k=tile_k, resident=resident,
                              fused=w_next is not None)

    return pl.pallas_call(
        kernel,
        out_shape=jax.ShapeDtypeStruct((Np, Hout), out_dtype),
        grid_spec=pltpu.PrefetchScalarGridSpec(
            num_scalar_prefetch=0,
            grid=(Np // tile_n, Np // tile_k),
            in_specs=in_specs,
            out_specs=pl.BlockSpec((tile_n, Hout), lambda i, k: (i, 0)),
            scratch_shapes=[pltpu.VMEM((tile_n, Hin), jnp.float32)],
        ),
        compiler_params=pltpu.CompilerParams(
            dimension_semantics=("parallel", "arbitrary"),
            vmem_limit_bytes=vmem_limit,
        ),
    )(*operands)


# ---------------------------------------------------------------------------
# Module-level wrappers
# ---------------------------------------------------------------------------
def init_gcn_params(key, in_features, out_features):
    """Matches GraphConvolution_Finding.reset_parameters (uniform ±1/sqrt(out))."""
    stdv = 1.0 / math.sqrt(out_features)
    kw, kb = jax.random.split(key)
    w = jax.random.uniform(kw, (in_features, out_features), jnp.float32,
                           minval=-stdv, maxval=stdv)
    b = jax.random.uniform(kb, (out_features,), jnp.float32,
                           minval=-stdv, maxval=stdv)
    return w, b


def gcn_encoder2(x, adj, params, *, compute_dtype=jnp.bfloat16):
    """GCN_Encoder2.forward (inference mode: dropout is identity)."""
    (w1, b1), (w2, b2) = params
    N, F = x.shape
    H1, H2 = w1.shape[1], w2.shape[1]
    H1p, H2p = _round_up(H1, LANE), _round_up(H2, LANE)

    budget = _vmem_budget_bytes()
    elt = jnp.dtype(compute_dtype).itemsize
    Np, tile_n, tile_k, resident = _plan_aggregation(
        N, max(H1p, H2p), budget, elt)
    tile_m = _plan_transform_tile(Np, F, H1p, tile_n, budget, elt)

    # Zero-pad weights/biases so every kernel output is lane-dense.
    w1p = jnp.zeros((F, H1p), compute_dtype).at[:, :H1].set(w1.astype(compute_dtype))
    b1p = jnp.zeros((H1p,), jnp.float32).at[:H1].set(b1)
    w2p = jnp.zeros((H1p, H2p), compute_dtype).at[:H1, :H2].set(w2.astype(compute_dtype))
    b2p = jnp.zeros((H2p,), jnp.float32).at[:H2].set(b2)

    # Zero-pad the node dimension when tiling requires it (exact: padded adj
    # rows/cols are zero, padded output rows/cols are sliced off).
    x_c = x.astype(compute_dtype)
    adj_c = adj.astype(compute_dtype)
    if Np != N:
        x_c = jnp.zeros((Np, F), compute_dtype).at[:N].set(x_c)
        adj_c = jnp.zeros((Np, Np), compute_dtype).at[:N, :N].set(adj_c)

    # Layer 1 transform: s1 = x @ W1
    s1 = feature_transform(x_c, w1p, tile_m=tile_m, vmem_limit=budget)
    # Fused layer-1 aggregation + layer-2 transform: s2 = relu(adj@s1 + b1) @ W2
    s2 = aggregate(adj_c, s1, b1p, w2p, tile_n=tile_n, tile_k=tile_k,
                   resident=resident, out_dtype=compute_dtype,
                   vmem_limit=budget)
    # Layer-2 aggregation: out = relu(adj @ s2 + b2)
    out = aggregate(adj_c, s2, b2p, None, tile_n=tile_n, tile_k=tile_k,
                    resident=resident, out_dtype=jnp.float32,
                    vmem_limit=budget)

    return out[:N, :H2]


def gcn_encoder2_ref(x, adj, params, *, compute_dtype=jnp.bfloat16):
    """Pure-JAX reference mirroring the kernel's cast pattern."""
    (w1, b1), (w2, b2) = params
    adj_c = adj.astype(compute_dtype)

    def layer(h, w, b, out_dtype):
        s = jnp.dot(h.astype(compute_dtype), w.astype(compute_dtype),
                    preferred_element_type=jnp.float32).astype(compute_dtype)
        o = jnp.dot(adj_c, s, preferred_element_type=jnp.float32) + b
        return jnp.maximum(o, 0.0).astype(out_dtype)

    h1 = layer(x, w1, b1, compute_dtype)
    return layer(h1, w2, b2, jnp.float32)


def gcn_encoder2_ref_f32(x, adj, params):
    """Pure f32 reference (matches the PyTorch module exactly)."""
    (w1, b1), (w2, b2) = params
    h1 = jnp.maximum(adj @ (x @ w1) + b1, 0.0)
    return jnp.maximum(adj @ (h1 @ w2) + b2, 0.0)


if __name__ == "__main__":
    # Small shapes consistent with the module's forward:
    #   N nodes = 8, n_feature = 16, n_hidden = 32, n_embed = 8
    N, n_feature, n_hidden, n_embed = 8, 16, 32, 8

    key = jax.random.PRNGKey(0)
    kx, kadj, k1, k2 = jax.random.split(key, 4)

    x = jax.random.normal(kx, (N, n_feature), jnp.float32)
    # symmetric, row-normalized dense adjacency (torch.spmm treated as dense)
    a = jax.random.uniform(kadj, (N, N), jnp.float32)
    adj = (a + a.T) * 0.5 + jnp.eye(N, dtype=jnp.float32)
    adj = adj / jnp.sum(adj, axis=1, keepdims=True)

    params = (init_gcn_params(k1, n_feature, n_hidden),
              init_gcn_params(k2, n_hidden, n_embed))

    # Default (bf16 MXU operands, f32 accumulation)
    out = gcn_encoder2(x, adj, params)
    out = jax.block_until_ready(out)
    assert out.shape == (N, n_embed)

    ref_bf16 = gcn_encoder2_ref(x, adj, params)
    assert jnp.allclose(out, ref_bf16, atol=1e-2, rtol=1e-2), \
        "mismatch vs bf16-matched reference"

    ref_f32 = gcn_encoder2_ref_f32(x, adj, params)
    assert jnp.allclose(out, ref_f32, atol=5e-2, rtol=5e-2), \
        "mismatch vs f32 reference"

    # f32 compute path should match the PyTorch-exact reference tightly.
    out_f32 = jax.block_until_ready(
        gcn_encoder2(x, adj, params, compute_dtype=jnp.float32))
    assert jnp.allclose(out_f32, ref_f32, atol=1e-5, rtol=1e-5), \
        "f32 path mismatch vs f32 reference"

    print("KERNEL_OK")
</pallas_src>

<mosaic_0001>
module attributes {stable_mosaic.version = 11 : i64} {
  func.func @_transform_kernel(%arg0: i32, %arg1: memref<8x16xbf16, #tpu.memory_space<vmem>>, %arg2: memref<16x128xbf16, #tpu.memory_space<vmem>>, %arg3: memref<8x128xbf16, #tpu.memory_space<vmem>>) attributes {dimension_semantics = [#tpu.dimension_semantics<parallel>], iteration_bounds = array<i64: 1>, scalar_prefetch = 0 : i64, scratch_operands = 0 : i64, tpu.core_type = #tpu.core_type<tc>, window_params = [{transform_indices = @transform_0, window_bounds = array<i64: 8, 16>}, {pipeline_mode = #tpu.pipeline_mode<synchronous>, transform_indices = @transform_1, window_bounds = array<i64: 16, 128>}, {transform_indices = @transform_2, window_bounds = array<i64: 8, 128>}]} {
    %c0 = arith.constant 0 : index
    %c0_0 = arith.constant 0 : index
    %0 = vector.load %arg1[%c0, %c0_0] : memref<8x16xbf16, #tpu.memory_space<vmem>>, vector<8x16xbf16>
    %c0_1 = arith.constant 0 : index
    %c0_2 = arith.constant 0 : index
    %1 = vector.load %arg2[%c0_1, %c0_2] : memref<16x128xbf16, #tpu.memory_space<vmem>>, vector<16x128xbf16>
    %cst = arith.constant dense<0.000000e+00> : vector<8x128xf32>
    %2 = tpu.matmul %0, %1, %cst {dimension_numbers = #tpu.dot_dimension_numbers<[1], [0], [0], [1], [0, 0, 1, 1], [], []>} : vector<8x16xbf16>, vector<16x128xbf16>, vector<8x128xf32> -> vector<8x128xf32>
    %3 = arith.truncf %2 : vector<8x128xf32> to vector<8x128xbf16>
    %c0_3 = arith.constant 0 : index
    %c0_4 = arith.constant 0 : index
    %4 = vector.load %arg3[%c0_3, %c0_4] : memref<8x128xbf16, #tpu.memory_space<vmem>>, vector<8x128xbf16>
    tpu.vector_store %arg3[%c0_3, %c0_4], %3 {strides = array<i32>} : memref<8x128xbf16, #tpu.memory_space<vmem>>, vector<8x128xbf16>,
    return
  }
  func.func @transform_0(%arg0: i32) -> (i32, i32) {
    %c0_i32 = arith.constant 0 : i32
    %c0_i32_0 = arith.constant 0 : i32
    return %arg0, %c0_i32 : i32, i32
  }
  func.func @transform_1(%arg0: i32) -> (i32, i32) {
    %c0_i32 = arith.constant 0 : i32
    %c0_i32_0 = arith.constant 0 : i32
    %c0_i32_1 = arith.constant 0 : i32
    return %c0_i32, %c0_i32_0 : i32, i32
  }
  func.func @transform_2(%arg0: i32) -> (i32, i32) {
    %c0_i32 = arith.constant 0 : i32
    %c0_i32_0 = arith.constant 0 : i32
    return %arg0, %c0_i32 : i32, i32
  }
}

</mosaic_0001>

<llo_original>
// kernel: tpu_custom_call.1
$region0: #{tpu_custom_call.1}
  #allocation0 [shape = 'u32[]', space=smem, size = 0x4, offset = 0x4, fixed_abs, tag = 'smem constant byte address 0x4 - core index']
  #allocation1 [shape = 'u32[72,128]{1,0:T(1,128)}', space=vmem, size = 0x9000, scoped, tag = 'internal scratch']
  %s0 = inlined_call_operand.hbm [shape: bf16[8,16], index: 0, kind: input, shape index: {}]
  %s1 = inlined_call_operand.hbm [shape: bf16[16,128], index: 1, kind: input, shape index: {}]
  %s2 = inlined_call_operand.hbm [shape: bf16[8,128], index: 2, kind: output, shape index: {}]
  %s3 = sld [smem:[#allocation0]]
  $region26: #{tpu_custom_call.1} parent=0
    _
  %s5 = ssub.s32 1, %s3
  %s6 = scalar_select 0, %s5, %s3
  $region1: #{tpu_custom_call.1} parent=0
    #allocation2 [shape = 'u8[2048]{0}', space=vmem, size = 0x800, scoped, tag = 'input window, operand 0, single buffered']
    #allocation3 [shape = 's32[1]{0}', space=sflag, size = 0x4, scoped, tag = 'scoped memory for tpu_custom_call.1']
    #allocation4 [shape = 's32[1]{0}', space=sflag, size = 0x4, scoped, tag = 'scoped memory for tpu_custom_call.1']
    #allocation5 [shape = 'u8[4096]{0}', space=vmem, size = 0x1000, scoped, tag = 'input window, operand 1, single buffered']
    #allocation6 [shape = 's32[1]{0}', space=sflag, size = 0x4, scoped, tag = 'scoped memory for tpu_custom_call.1']
    #allocation7 [shape = 'u8[2048]{0}', space=vmem, size = 0x800, scoped, tag = 'output window, operand 0, single buffered']
    %7 = vsyncpa [#allocation3], 0
    %8 = vsyncpa [#allocation6], 0
    %9 = vsyncpa [#allocation4], 0
    // Predicated region
    $region2: #{tpu_custom_call.1} parent=1 // pred_check
      _
    $region3: #{tpu_custom_call.1} parent=1 // pred_check_branch
      %11 = sbr.rel (0) target = $region5
    $region4: #{tpu_custom_call.1} parent=1 // pred_region
      %13 = vsyncadd [#allocation3], 0
      %s15 = sshll.u32 %s0, 4
      %s16 = int_to_ptr.hbm [resolvable:$true] %s15
      %s17 = sshll.u32 [#allocation2], 4
      %s18 = int_to_ptr.vmem [resolvable:$true] %s17
      %20 = dma.hbm_to_vmem [thread:$0]  %s16, 64, %s18, [#allocation3]
    $region5: #{tpu_custom_call.1} parent=1 // pred_fallthru
      _
    // Predicated region
    $region6: #{tpu_custom_call.1} parent=1 // pred_check
      _
    $region7: #{tpu_custom_call.1} parent=1 // pred_check_branch
      %22 = sbr.rel (0) target = $region9
    $region8: #{tpu_custom_call.1} parent=1 // pred_region
      %24 = vsyncadd [#allocation6], 0
      %s25 = sshll.u32 %s1, 4
      %s26 = int_to_ptr.hbm [resolvable:$true] %s25
      %s27 = sshll.u32 [#allocation5], 4
      %s28 = int_to_ptr.vmem [resolvable:$true] %s27
      %33 = dma.hbm_to_vmem [thread:$0]  %s26, 128, %s28, [#allocation6], 64, 64, 4
    $region9: #{tpu_custom_call.1} parent=1 // pred_fallthru
      _
    // Predicated region
    $region10: #{tpu_custom_call.1} parent=1 // pred_check
      _
    $region11: #{tpu_custom_call.1} parent=1 // pred_check_branch
      %35 = sbr.rel (0) target = $region13
    $region12: #{tpu_custom_call.1} parent=1 // pred_region
      %37 = dma.done [#allocation3], 64
    $region13: #{tpu_custom_call.1} parent=1 // pred_fallthru
      _
    // Predicated region
    $region14: #{tpu_custom_call.1} parent=1 // pred_check
      _
    $region15: #{tpu_custom_call.1} parent=1 // pred_check_branch
      %39 = sbr.rel (0) target = $region17
    $region16: #{tpu_custom_call.1} parent=1 // pred_region
      %41 = dma.done [#allocation6], 128
    $region17: #{tpu_custom_call.1} parent=1 // pred_fallthru
      _
    %v43 = vld [vmem:[#allocation2] sm:$0xf]
    %v44 = vld [vmem:[#allocation5] sm:$0xf]
    %v45 = vld [vmem:[#allocation5 + $0x4] sm:$0xf]
    %v48 = vunpack.c.l.b16 %v44
    %v49 = vunpack.c.l.b16 %v45
    %v50 = vpack.c.b16 %v49, %v48
    %vm52 = vcmask 130048
    %v54 = vsel %vm52, %v43, 0
    %56 = vmatpush.bf16.msra.mxu0 0
    %57 = vmatpush.bf16.msra.mxu0 0
    %58 = vmatpush.bf16.msra.mxu0 0
    %59 = vmatpush.bf16.msra.mxu0 0
    %60 = vmatpush.bf16.msra.mxu0 0
    %61 = vmatpush.bf16.msra.mxu0 0
    %62 = vmatpush.bf16.msra.mxu0 0
    %63 = vmatpush.bf16.msra.mxu0 %v50
    %64 = vmatmul.bf16.gmra.mxu0 %v54
    %v65 = vpop.f32.mrf.mxu0
    %v66 = vadd.f32 0.0, %v65
    %v67 = vpop.f32.mrf.mxu0
    %68 = vdwg.mxu0
    %v69 = vpack.c.bf16 %v66, %v66
    %70 = vst [vmem:[#allocation7] sm:$0xf] %v69
    // Predicated region
    $region18: #{tpu_custom_call.1} parent=1 // pred_check
      _
    $region19: #{tpu_custom_call.1} parent=1 // pred_check_branch
      %72 = sbr.rel (0) target = $region21
    $region20: #{tpu_custom_call.1} parent=1 // pred_region
      %74 = vsyncadd [#allocation4], 0
      %s76 = sshll.u32 [#allocation7], 4
      %s77 = int_to_ptr.vmem [resolvable:$true] %s76
      %s78 = sshll.u32 %s2, 4
      %s79 = int_to_ptr.hbm [resolvable:$true] %s78
      %81 = dma.vmem_to_hbm [thread:$0]  %s77, 64, %s79, [#allocation4]
    $region21: #{tpu_custom_call.1} parent=1 // pred_fallthru
      _
    // Predicated region
    $region22: #{tpu_custom_call.1} parent=1 // pred_check
      _
    $region23: #{tpu_custom_call.1} parent=1 // pred_check_branch
      %83 = sbr.rel (0) target = $region25
    $region24: #{tpu_custom_call.1} parent=1 // pred_region
      %85 = dma.done [#allocation4], 64
    $region25: #{tpu_custom_call.1} parent=1 // pred_fallthru
      _
    %86 = vsyncpa [#allocation3], 1
    %87 = vsyncpa [#allocation6], 1
    %88 = vsyncpa [#allocation4], 1

</llo_original>
